<compile_context>
chip_gen: v7x
topology: tpu7x:2x2x1
jax: 0.10.0
libtpu: 0.0.40
codegen_flags: <defaults>
</compile_context>

<pallas_src>
import functools

import jax
import jax.numpy as jnp
from jax import lax
from jax.experimental import pallas as pl
from jax.experimental.pallas import tpu as pltpu


def _round_up(x: int, m: int) -> int:
    return ((x + m - 1) // m) * m


def _lambda4_kernel(f_ref, out_ref, acc_ref, prev_ref, *,
                    rank: int, tm: int, t: int, scale: float):
    i = pl.program_id(0)

    @pl.when(i == 0)
    def _init():
        acc_ref[...] = jnp.zeros_like(acc_ref)

    # Shifted row windows read directly from the ref: rows [1, tm) and [0, tm-1).
    xa = f_ref[pl.ds(1, tm - 1), :].astype(jnp.float32)   # (tm-1, 2R)
    xb = f_ref[pl.ds(0, tm - 1), :].astype(jnp.float32)   # (tm-1, 2R)
    dd = xa - xb
    d2 = dd * dd                                          # lane-dense squares
    s = d2[:, :rank] + d2[:, rank:]                       # |ddiff|^2  (tm-1, R)
    q = s * s                                             # (a^2 + b^2)^2

    # Mask rows of the (possibly ragged) last tile: pair j (rows i*tm+j,
    # i*tm+j+1) is valid iff its second row index is < t.
    row = lax.broadcasted_iota(jnp.int32, (tm - 1, rank), 0)
    valid = row < (t - 1 - i * tm)
    acc_ref[...] += jnp.where(valid, q, 0.0)              # pure VPU accumulate

    # Cross-tile boundary pair: this tile's row 0 minus previous tile's last
    # row (carried in prev_ref). Always a valid pair for i > 0.
    @pl.when(i > 0)
    def _boundary():
        db = f_ref[pl.ds(0, 1), :].astype(jnp.float32) - prev_ref[...]
        db2 = db * db
        sb = db2[:, :rank] + db2[:, rank:]
        acc_ref[pl.ds(0, 1), :] = acc_ref[pl.ds(0, 1), :] + sb * sb

    # Carry this tile's last row for the next grid step.
    prev_ref[...] = f_ref[pl.ds(tm - 1, 1), :].astype(jnp.float32)

    # Epilogue: single cross-lane reduce + SMEM scalar write, last step only.
    @pl.when(i == pl.num_programs(0) - 1)
    def _epilogue():
        out_ref[0, 0] = jnp.sum(acc_ref[...]) * scale


def lambda4(factor: jax.Array, weight: float) -> jax.Array:
    """Pallas implementation of Lambda4.forward(factor)."""
    t, two_rank = factor.shape
    if t < 2:
        raise ValueError("Lambda4 requires at least 2 time steps (T >= 2).")
    rank = two_rank // 2
    scale = float(weight) / float(t - 1)   # folded compile-time constant

    # Row-tile size: multiple of 8, <= 256 rows, and sized so one input block
    # stays <= ~4 MiB (keeps double-buffered blocks well under VMEM on v7x).
    bytes_per_row = two_rank * 4
    tm = max(8, min(256, ((4 << 20) // bytes_per_row) // 8 * 8))
    tm = min(tm, _round_up(t, 8))
    grid = (pl.cdiv(t, tm),)

    kernel = functools.partial(_lambda4_kernel, rank=rank, tm=tm, t=t, scale=scale)

    # TODO(synk): on v7x a leading size-2 "parallel" grid axis could split the
    # T-reduction across the two TensorCores (two partial outputs summed in
    # the wrapper); omitted here to keep the sequential boundary carry simple.
    out = pl.pallas_call(
        kernel,
        out_shape=jax.ShapeDtypeStruct((1, 1), jnp.float32),
        grid=grid,
        in_specs=[pl.BlockSpec((tm, two_rank), lambda i: (i, 0))],
        out_specs=pl.BlockSpec(memory_space=pltpu.MemorySpace.SMEM),
        scratch_shapes=[
            pltpu.VMEM((tm - 1, rank), jnp.float32),   # per-lane partial sums
            pltpu.VMEM((1, two_rank), jnp.float32),    # carried boundary row
        ],
        compiler_params=pltpu.CompilerParams(
            dimension_semantics=("arbitrary",)),       # sequential reduction + carry
        cost_estimate=pl.CostEstimate(
            flops=7 * rank * (t - 1),
            transcendentals=0,
            bytes_accessed=t * two_rank * factor.dtype.itemsize + 4),
    )(factor)
    return out[0, 0]


def _lambda4_ref(factor: jax.Array, weight: float) -> jax.Array:
    ddiff = factor[1:] - factor[:-1]
    rank = ddiff.shape[1] // 2
    diff = jnp.sqrt(ddiff[:, :rank] ** 2 + ddiff[:, rank:] ** 2) ** 4
    return weight * jnp.sum(diff) / (factor.shape[0] - 1)


if __name__ == "__main__":
    key = jax.random.PRNGKey(0)
    weight = 0.01
    k1, k2 = jax.random.split(key)

    # Small case: single tile (T=8, rank=16 -> factor (8, 32)).
    f_small = jax.random.normal(k1, (8, 2 * 16), dtype=jnp.float32)
    out_s = jax.block_until_ready(lambda4(f_small, weight))
    ref_s = jax.block_until_ready(_lambda4_ref(f_small, weight))
    assert jnp.allclose(out_s, ref_s, rtol=1e-4, atol=1e-5), (out_s, ref_s)

    # Larger case: multiple tiles + ragged last tile (exercises carry + mask).
    f_big = jax.random.normal(k2, (300, 2 * 32), dtype=jnp.float32)
    out_b = jax.block_until_ready(lambda4(f_big, weight))
    ref_b = jax.block_until_ready(_lambda4_ref(f_big, weight))
    assert jnp.allclose(out_b, ref_b, rtol=1e-4, atol=1e-4), (out_b, ref_b)

    print("KERNEL_OK")
</pallas_src>

<mosaic_0001>
module attributes {stable_mosaic.version = 11 : i64} {
  func.func @_lambda4_kernel(%arg0: i32, %arg1: memref<8x32xf32, #tpu.memory_space<vmem>>, %arg2: memref<1x1xf32, #tpu.memory_space<smem>>, %arg3: memref<7x16xf32, #tpu.memory_space<vmem>>, %arg4: memref<1x32xf32, #tpu.memory_space<vmem>>) attributes {dimension_semantics = [#tpu.dimension_semantics<arbitrary>], iteration_bounds = array<i64: 1>, scalar_prefetch = 0 : i64, scratch_operands = 2 : i64, tpu.core_type = #tpu.core_type<tc>, window_params = [{transform_indices = @transform_0, window_bounds = array<i64: 8, 32>}, {transform_indices = @transform_1, window_bounds = array<i64: 1, 1>}]} {
    %c0_i32 = arith.constant 0 : i32
    %0 = arith.cmpi eq, %arg0, %c0_i32 : i32
    %1 = arith.extui %0 : i1 to i32
    %c0_i32_0 = arith.constant 0 : i32
    %2 = arith.cmpi ne, %1, %c0_i32_0 : i32
    scf.if %2 {
      %cst_14 = arith.constant 0.000000e+00 : f32
      %29 = vector.broadcast %cst_14 : f32 to vector<7x16xf32>
      %c0_15 = arith.constant 0 : index
      %c0_16 = arith.constant 0 : index
      %30 = vector.load %arg3[%c0_15, %c0_16] : memref<7x16xf32, #tpu.memory_space<vmem>>, vector<7x16xf32>
      tpu.vector_store %arg3[%c0_15, %c0_16], %29 {strides = array<i32>} : memref<7x16xf32, #tpu.memory_space<vmem>>, vector<7x16xf32>,
    } else {
    }
    %c1 = arith.constant 1 : index
    %c0 = arith.constant 0 : index
    %3 = vector.load %arg1[%c1, %c0] : memref<8x32xf32, #tpu.memory_space<vmem>>, vector<7x32xf32>
    %c0_1 = arith.constant 0 : index
    %c0_2 = arith.constant 0 : index
    %4 = vector.load %arg1[%c0_1, %c0_2] : memref<8x32xf32, #tpu.memory_space<vmem>>, vector<7x32xf32>
    %5 = arith.subf %3, %4 : vector<7x32xf32>
    %6 = arith.mulf %5, %5 : vector<7x32xf32>
    %7 = vector.extract_strided_slice %6 {offsets = [0, 0], sizes = [7, 16], strides = [1, 1]} : vector<7x32xf32> to vector<7x16xf32>
    %8 = vector.extract_strided_slice %6 {offsets = [0, 16], sizes = [7, 16], strides = [1, 1]} : vector<7x32xf32> to vector<7x16xf32>
    %9 = arith.addf %7, %8 : vector<7x16xf32>
    %10 = arith.mulf %9, %9 : vector<7x16xf32>
    %11 = tpu.iota {dimensions = array<i32: 0>} : vector<7x16xi32>
    %c8_i32 = arith.constant 8 : i32
    %12 = arith.muli %arg0, %c8_i32 : i32
    %c7_i32 = arith.constant 7 : i32
    %13 = arith.subi %c7_i32, %12 : i32
    %14 = vector.broadcast %13 : i32 to vector<7x16xi32>
    %15 = arith.cmpi slt, %11, %14 : vector<7x16xi32>
    %c0_3 = arith.constant 0 : index
    %c0_4 = arith.constant 0 : index
    %16 = vector.load %arg3[%c0_3, %c0_4] : memref<7x16xf32, #tpu.memory_space<vmem>>, vector<7x16xf32>
    %cst = arith.constant 0.000000e+00 : f32
    %17 = vector.broadcast %cst : f32 to vector<7x16xf32>
    %18 = arith.select %15, %10, %17 : vector<7x16xi1>, vector<7x16xf32>
    %19 = arith.addf %16, %18 : vector<7x16xf32>
    %c0_5 = arith.constant 0 : index
    %c0_6 = arith.constant 0 : index
    %20 = vector.load %arg3[%c0_5, %c0_6] : memref<7x16xf32, #tpu.memory_space<vmem>>, vector<7x16xf32>
    tpu.vector_store %arg3[%c0_5, %c0_6], %19 {strides = array<i32>} : memref<7x16xf32, #tpu.memory_space<vmem>>, vector<7x16xf32>,
    %c0_i32_7 = arith.constant 0 : i32
    %21 = arith.cmpi sgt, %arg0, %c0_i32_7 : i32
    %22 = arith.extui %21 : i1 to i32
    %c0_i32_8 = arith.constant 0 : i32
    %23 = arith.cmpi ne, %22, %c0_i32_8 : i32
    scf.if %23 {
      %c0_14 = arith.constant 0 : index
      %c0_15 = arith.constant 0 : index
      %29 = vector.load %arg1[%c0_14, %c0_15] : memref<8x32xf32, #tpu.memory_space<vmem>>, vector<1x32xf32>
      %c0_16 = arith.constant 0 : index
      %c0_17 = arith.constant 0 : index
      %30 = vector.load %arg4[%c0_16, %c0_17] : memref<1x32xf32, #tpu.memory_space<vmem>>, vector<1x32xf32>
      %31 = arith.subf %29, %30 : vector<1x32xf32>
      %32 = arith.mulf %31, %31 : vector<1x32xf32>
      %33 = vector.extract_strided_slice %32 {offsets = [0, 0], sizes = [1, 16], strides = [1, 1]} : vector<1x32xf32> to vector<1x16xf32>
      %34 = vector.extract_strided_slice %32 {offsets = [0, 16], sizes = [1, 16], strides = [1, 1]} : vector<1x32xf32> to vector<1x16xf32>
      %35 = arith.addf %33, %34 : vector<1x16xf32>
      %c0_18 = arith.constant 0 : index
      %c0_19 = arith.constant 0 : index
      %36 = vector.load %arg3[%c0_18, %c0_19] : memref<7x16xf32, #tpu.memory_space<vmem>>, vector<1x16xf32>
      %37 = arith.mulf %35, %35 : vector<1x16xf32>
      %38 = arith.addf %36, %37 : vector<1x16xf32>
      %c0_20 = arith.constant 0 : index
      %c0_21 = arith.constant 0 : index
      %39 = vector.load %arg3[%c0_20, %c0_21] : memref<7x16xf32, #tpu.memory_space<vmem>>, vector<1x16xf32>
      tpu.vector_store %arg3[%c0_20, %c0_21], %38 {strides = array<i32>} : memref<7x16xf32, #tpu.memory_space<vmem>>, vector<1x16xf32>,
    } else {
    }
    %c7 = arith.constant 7 : index
    %c0_9 = arith.constant 0 : index
    %24 = vector.load %arg1[%c7, %c0_9] : memref<8x32xf32, #tpu.memory_space<vmem>>, vector<1x32xf32>
    %c0_10 = arith.constant 0 : index
    %c0_11 = arith.constant 0 : index
    %25 = vector.load %arg4[%c0_10, %c0_11] : memref<1x32xf32, #tpu.memory_space<vmem>>, vector<1x32xf32>
    tpu.vector_store %arg4[%c0_10, %c0_11], %24 {strides = array<i32>} : memref<1x32xf32, #tpu.memory_space<vmem>>, vector<1x32xf32>,
    %c0_i32_12 = arith.constant 0 : i32
    %26 = arith.cmpi eq, %arg0, %c0_i32_12 : i32
    %27 = arith.extui %26 : i1 to i32
    %c0_i32_13 = arith.constant 0 : i32
    %28 = arith.cmpi ne, %27, %c0_i32_13 : i32
    scf.if %28 {
      %c0_14 = arith.constant 0 : index
      %c0_15 = arith.constant 0 : index
      %29 = vector.load %arg3[%c0_14, %c0_15] : memref<7x16xf32, #tpu.memory_space<vmem>>, vector<7x16xf32>
      %30 = vector.shape_cast %29 : vector<7x16xf32> to vector<1x7x16xf32>
      %cst_16 = arith.constant dense<0.000000e+00> : vector<1xf32>
      %31 = vector.multi_reduction <add>, %30, %cst_16 [1, 2] : vector<1x7x16xf32> to vector<1xf32>
      %32 = vector.shape_cast %31 : vector<1xf32> to vector<1x1x1xf32>
      %33 = vector.extract %32[0, 0, 0] : f32 from vector<1x1x1xf32>
      %cst_17 = arith.constant 0.00142857141 : f32
      %34 = arith.mulf %33, %cst_17 : f32
      %c0_18 = arith.constant 0 : index
      %c0_19 = arith.constant 0 : index
      %35 = memref.load %arg2[%c0_18, %c0_19] : memref<1x1xf32, #tpu.memory_space<smem>>
      memref.store %34, %arg2[%c0_18, %c0_19] : memref<1x1xf32, #tpu.memory_space<smem>>
    } else {
    }
    return
  }
  func.func @transform_0(%arg0: i32) -> (i32, i32) {
    %c0_i32 = arith.constant 0 : i32
    %c0_i32_0 = arith.constant 0 : i32
    return %arg0, %c0_i32 : i32, i32
  }
  func.func @transform_1(%arg0: i32) -> (i32, i32) {
    %c0_i32 = arith.constant 0 : i32
    %c0_i32_0 = arith.constant 0 : i32
    %c0_i32_1 = arith.constant 0 : i32
    return %c0_i32, %c0_i32_0 : i32, i32
  }
}

</mosaic_0001>

<llo_original>
// kernel: tpu_custom_call.1
$region0: #{tpu_custom_call.1}
  #allocation0 [shape = 'u32[]', space=smem, size = 0x4, offset = 0x4, fixed_abs, tag = 'smem constant byte address 0x4 - core index']
  #allocation1 [shape = 'u32[144,128]{1,0:T(1,128)}', space=vmem, size = 0x12000, scoped, tag = 'internal scratch']
  #allocation2 [shape = 'f32[7,16]{1,0:T(8,128)}', space=vmem, size = 0x1000, scoped, tag = 'scratch operand']
  #allocation3 [shape = 'f32[1,32]{1,0:T(1,128)}', space=vmem, size = 0x200, scoped, tag = 'scratch operand']
  %s0 = inlined_call_operand.hbm [shape: f32[8,32], index: 0, kind: input, shape index: {}]
  %s1 = inlined_call_operand.hbm [shape: f32[1,1], index: 1, kind: output, shape index: {}]
  %s2 = sld [smem:[#allocation0]]
  $region30: #{tpu_custom_call.1} parent=0
    _
  %s4 = ssub.s32 1, %s2
  %s5 = scalar_select 0, %s4, %s2
  $region1: #{tpu_custom_call.1} parent=0
    #allocation4 [shape = 'u8[4096]{0}', space=vmem, size = 0x1000, scoped, tag = 'input window, operand 0, single buffered']
    #allocation5 [shape = 's32[1]{0}', space=sflag, size = 0x4, scoped, tag = 'scoped memory for tpu_custom_call.1']
    #allocation6 [shape = 's32[1]{0}', space=sflag, size = 0x4, scoped, tag = 'scoped memory for tpu_custom_call.1']
    #allocation7 [shape = 'u8[512]{0}', space=smem, size = 0x200, scoped, tag = 'output window, operand 0, single buffered']
    %6 = vsyncpa [#allocation5], 0
    %7 = vsyncpa [#allocation6], 0
    // Predicated region
    $region2: #{tpu_custom_call.1} parent=1 // pred_check
      _
    $region3: #{tpu_custom_call.1} parent=1 // pred_check_branch
      %9 = sbr.rel (0) target = $region5
    $region4: #{tpu_custom_call.1} parent=1 // pred_region
      %s11 = ssub.s32 128, 128
      %12 = vsyncadd [#allocation5], %s11
      %s14 = sshll.u32 [#allocation4], 4
      %s15 = int_to_ptr.vmem [resolvable:$true] %s14
      %17 = dma.hbm_to_vmem [thread:$0]  %s0, 128, %s15, [#allocation5]
    $region5: #{tpu_custom_call.1} parent=1 // pred_fallthru
      _
    // Predicated region
    $region6: #{tpu_custom_call.1} parent=1 // pred_check
      _
    $region7: #{tpu_custom_call.1} parent=1 // pred_check_branch
      %19 = sbr.rel (0) target = $region9
    $region8: #{tpu_custom_call.1} parent=1 // pred_region
      %20 = dma.done [#allocation5], 128
    $region9: #{tpu_custom_call.1} parent=1 // pred_fallthru
      _
    %p21 = scmp.eq.s32.totalorder 0, 0
    // Predicated region
    $region10: #{tpu_custom_call.1} parent=1 // pred_check
      %p22 = pneg %p21
    $region11: #{tpu_custom_call.1} parent=1 // pred_check_branch
      %24 = sbr.rel (%p22) target = $region13
    $region12: #{tpu_custom_call.1} parent=1 // pred_region
      %vm25 = vcmask 129024
      %26 = vst.msk [vmem:[#allocation2] sm:$0x7f] %vm25, 0.0
    $region13: #{tpu_custom_call.1} parent=1 // pred_fallthru
      _
    %v27 = vld [vmem:[#allocation4 + $0x1] sm:$0x7f]
    %v28 = vld [vmem:[#allocation4] sm:$0x7f]
    %v29 = vsub.f32 %v27, %v28
    %v30 = vmul.f32 %v29, %v29
    %32 = vrot.lane.b32.xlu0 %v30, 112
    %v33 = vpop.permute.xlu0 %32
    %v35 = vadd.f32 %v30, %v33
    %v36 = vmul.f32 %v35, %v35
    %v37 = vlaneseq
    %v38 = vshrl.u32 %v37, 7
    %s39 = smul.u32 0, 8
    %s40 = ssub.s32 7, %s39
    %v41 = vstv %s40
    %vm42 = vcmp.lt.s32.totalorder %v38, %v41
    %v43 = vld [vmem:[#allocation2] sm:$0x7f]
    %v44 = vsel %vm42, %v36, 0.0
    %v45 = vadd.f32 %v43, %v44
    %vm46 = vcmask 129024
    %47 = vst.msk [vmem:[#allocation2] sm:$0x7f] %vm46, %v45
    %p48 = scmp.gt.s32.totalorder 0, 0
    // Predicated region
    $region14: #{tpu_custom_call.1} parent=1 // pred_check
      %p49 = pneg %p48
    $region15: #{tpu_custom_call.1} parent=1 // pred_check_branch
      %51 = sbr.rel (%p49) target = $region17
    $region16: #{tpu_custom_call.1} parent=1 // pred_region
      %v52 = vld [vmem:[#allocation4] sm:$0x1]
      %v53 = vld [vmem:[#allocation3] sm:$0x1]
      %v54 = vsub.f32 %v52, %v53
      %v55 = vmul.f32 %v54, %v54
      %57 = vrot.lane.b32.xlu0 %v55, 112
      %v58 = vpop.permute.xlu0 %57
      %v60 = vadd.f32 %v55, %v58
      %v61 = vld [vmem:[#allocation2] sm:$0x1]
      %v62 = vmul.f32 %v60, %v60
      %v63 = vadd.f32 %v61, %v62
      %vm64 = vcmask 122880
      %65 = vst.msk [vmem:[#allocation2] sm:$0x1] %vm64, %v63
    $region17: #{tpu_custom_call.1} parent=1 // pred_fallthru
      _
    %v66 = vld [vmem:[#allocation4 + $0x7] sm:$0x1]
    %vm67 = vcmask 253952
    %68 = vst.msk [vmem:[#allocation3] sm:$0x1] %vm67, %v66
    // Predicated region
    $region18: #{tpu_custom_call.1} parent=1 // pred_check
      %p69 = pneg %p21
    $region19: #{tpu_custom_call.1} parent=1 // pred_check_branch
      %71 = sbr.rel (%p69) target = $region21
    $region20: #{tpu_custom_call.1} parent=1 // pred_region
      %v72 = vld [vmem:[#allocation2] sm:$0x7f]
      %v73 = vsel %vm46, %v72, 0.0
      %74 = vadd.xlane.f32.xlu0 %v73
      %v75 = vpop.xlane.xlu0 %74
      %v76 = vrot.slane %v75, 4
      %v77 = vadd.f32 %v75, %v76
      %v78 = vrot.slane %v77, 2
      %v79 = vadd.f32 %v77, %v78
      %v80 = vrot.slane %v79, 1
      %v81 = vadd.f32 %v79, %v80
      %s82 = vtos %v81
      %s83 = smul.f32 %s82, 0.0014285714
      %s84 = scalar_lea.smem [#allocation7], 0
      %85 = sst [smem:[%s84]] %s83
    $region21: #{tpu_custom_call.1} parent=1 // pred_fallthru
      _
    // Predicated region
    $region22: #{tpu_custom_call.1} parent=1 // pred_check
      _
    $region23: #{tpu_custom_call.1} parent=1 // pred_check_branch
      %87 = sbr.rel (0) target = $region25
    $region24: #{tpu_custom_call.1} parent=1 // pred_region
      %s89 = ssub.s32 16, 16
      %90 = vsyncadd [#allocation6], %s89
      %93 = dma.smem_to_hbm [#allocation7], 16, %s1, [#allocation6]
    $region25: #{tpu_custom_call.1} parent=1 // pred_fallthru
      _
    // Predicated region
    $region26: #{tpu_custom_call.1} parent=1 // pred_check
      _
    $region27: #{tpu_custom_call.1} parent=1 // pred_check_branch
      %95 = sbr.rel (0) target = $region29
    $region28: #{tpu_custom_call.1} parent=1 // pred_region
      %96 = dma.done [#allocation6], 16
    $region29: #{tpu_custom_call.1} parent=1 // pred_fallthru
      _
    %97 = sfence
    %98 = vsyncpa [#allocation5], 1
    %99 = vsyncpa [#allocation6], 1

</llo_original>
